<compile_context>
chip_gen: v5e
topology: v5e:2x2
jax: 0.10.0
libtpu: 0.0.40
codegen_flags: <defaults>
</compile_context>

<pallas_src>
import jax
import jax.numpy as jnp
from jax.experimental import pallas as pl
from jax.experimental.pallas import tpu as pltpu

NUM_EMBEDDINGS = 10  # hard-coded in the module (num_embeddings=10)


def _round_up(x, m):
    return ((x + m - 1) // m) * m


def _make_kernel(num_chunks, chunk_rows, out_width, vocab):
    """Kernel body for one grid block made of `num_chunks` sub-chunks.

    ids_ref: (num_chunks, chunk_rows, Lf)        int8  masked ids (-1 = invalid/pad)
    tbl_ref: (vocab, Lf, out_width)              f32   per-vocab block-placement tables
    out_ref: (num_chunks, chunk_rows, out_width) f32
    """

    def kernel(ids_ref, tbl_ref, out_ref):
        def compute(idx_i8):
            idx = idx_i8.astype(jnp.int32)                      # (chunk_rows, Lf)
            acc = jnp.zeros((chunk_rows, out_width), jnp.float32)
            for v in range(vocab):                              # static 10-way unroll
                # No masking here: invalid positions are -1 and never match v.
                eq = (idx == v).astype(jnp.float32)             # (chunk_rows, Lf)
                acc = acc + jnp.dot(eq, tbl_ref[v],
                                    preferred_element_type=jnp.float32)
            return acc

        if num_chunks == 1:
            out_ref[0] = compute(ids_ref[0])
        else:
            # fori_loop (not unrolled) bounds the live vreg set to one sub-chunk.
            def body(c, carry):
                out_ref[c] = compute(ids_ref[c])
                return carry

            jax.lax.fori_loop(0, num_chunks, body, 0)

    return kernel


def sketch_embedding_forward(sketchs, sketch_lengths, emb_table, *, block_rows=None):
    """Pallas forward pass.

    sketchs:        (B, L) int
    sketch_lengths: (B,)   int
    emb_table:      (10, E) float32
    returns:        (B, E) float32
    """
    B, L = sketchs.shape
    V, E = emb_table.shape
    emb = emb_table.astype(jnp.float32)

    # ---- Row-folding factor: make output (and compares) lane-dense. ----------
    g = max(1, 128 // E)
    # Keep the resident replicated table modest.
    while g > 1 and V * (g * L) * (g * E) * 4 > (4 << 20):
        g -= 1
    Lf, GE = g * L, g * E

    # ---- Block sizing (original rows per grid step). --------------------------
    GR = 32 * g                      # TB/g must be a multiple of 32 (int8 tiling)
    if block_rows is None:
        # Aim for >= ~8 grid steps when B allows (v7x: 2 TCs x >=4 pipelined
        # steps each); cap at 2048 rows so double-buffered blocks stay small.
        tb = min(_round_up(2048, GR), _round_up(pl.cdiv(B, 8), GR))
    else:
        tb = _round_up(block_rows, GR)
    TB = max(GR, tb)                 # original rows per grid step
    B_pad = _round_up(B, TB)
    TBf = TB // g                    # folded rows per grid step
    CSf = 64 if (TBf >= 64 and TBf % 64 == 0) else 32   # folded rows per sub-chunk
    CPB = TBf // CSf                 # sub-chunks per grid step
    n_chunks_total = (B_pad // g) // CSf
    grid = (B_pad // TB,)

    # ---- ids: length-mask + range-clamp fused into the int8 cast, pad, fold. --
    ids32 = sketchs.astype(jnp.int32)
    lens = sketch_lengths.astype(jnp.int32)
    pos = jnp.arange(L, dtype=jnp.int32)[None, :]
    valid = (pos < lens[:, None]) & (ids32 >= 0) & (ids32 < V)
    ids8 = jnp.where(valid, ids32, -1).astype(jnp.int8)          # (B, L)
    if B_pad != B:
        ids8 = jnp.pad(ids8, ((0, B_pad - B), (0, 0)), constant_values=-1)
    # (B_pad, L) -> (Bf, g*L) -> (n_chunks_total, CSf, Lf): contiguous reshapes (free).
    ids_blk = ids8.reshape(n_chunks_total, CSf, Lf)

    # ---- Per-vocab block-placement tables (built once from the 10xE table). ---
    # T[v, p, j*E + e] = emb[v, e] if p // L == j else 0, so
    #   out_folded = sum_v (ids == v) @ T[v]
    # places each original row's embedding-sum in its own E-wide lane block.
    seg_p = jnp.arange(Lf, dtype=jnp.int32) // L                 # (Lf,)
    seg_c = jnp.arange(GE, dtype=jnp.int32) // E                 # (GE,)
    bd = (seg_p[:, None] == seg_c[None, :]).astype(jnp.float32)  # (Lf, GE)
    tbl = jnp.tile(emb, (1, g))[:, None, :] * bd[None, :, :]     # (V, Lf, GE)

    # ---- VMEM budget (explicit, per review). ----------------------------------
    ids_bytes = 2 * CPB * CSf * Lf            # double-buffered int8 id blocks
    out_bytes = 2 * CPB * CSf * GE * 4        # double-buffered f32 output blocks
    tbl_bytes = 2 * V * Lf * GE * 4           # resident tables (conservative x2)
    vmem_limit = int(max(ids_bytes + out_bytes + tbl_bytes + (2 << 20), 32 << 20))

    out = pl.pallas_call(
        _make_kernel(CPB, CSf, GE, V),
        out_shape=jax.ShapeDtypeStruct((n_chunks_total, CSf, GE), jnp.float32),
        grid=grid,
        in_specs=[
            pl.BlockSpec((CPB, CSf, Lf), lambda i: (i, 0, 0)),   # int8 masked ids
            pl.BlockSpec((V, Lf, GE), lambda i: (0, 0, 0)),      # tables, resident
        ],
        out_specs=pl.BlockSpec((CPB, CSf, GE), lambda i: (i, 0, 0)),
        compiler_params=pltpu.CompilerParams(
            dimension_semantics=("parallel",),
            vmem_limit_bytes=vmem_limit),
    )(ids_blk, tbl)

    # Un-fold: (n_chunks_total, CSf, g*E) -> (B_pad, E), then drop padding rows.
    return out.reshape(B_pad, E)[:B]


def reference_forward(sketchs, sketch_lengths, emb_table):
    """Pure-JAX reference mirroring the PyTorch module."""
    emb = emb_table[sketchs]                                   # (B, L, E)
    max_len = sketchs.shape[1]                                 # == lengths.max()
    mask = (jnp.arange(max_len)[None, :] < sketch_lengths[:, None]).astype(jnp.float32)
    return (emb * mask[:, :, None]).sum(axis=-2)               # (B, E)


if __name__ == "__main__":
    key = jax.random.PRNGKey(0)
    k_emb, k_idx, k_idx2, k_len2, k_idx3, k_len3 = jax.random.split(key, 6)

    # --- small case matching the module's implied shapes -------------------
    B, L, E = 2, 8, 32
    emb_table = jax.random.normal(k_emb, (NUM_EMBEDDINGS, E), dtype=jnp.float32)
    sketchs = jax.random.randint(k_idx, (B, L), 0, NUM_EMBEDDINGS, dtype=jnp.int32)
    sketch_lengths = jnp.array([L, 5], dtype=jnp.int32)        # max(lengths) == L

    out = sketch_embedding_forward(sketchs, sketch_lengths, emb_table)
    out = jax.block_until_ready(out)
    ref = reference_forward(sketchs, sketch_lengths, emb_table)
    assert out.shape == (B, E)
    assert jnp.allclose(out, ref, atol=1e-4, rtol=1e-5), "mismatch vs reference (small)"

    # --- case exercising padding and a multi-step grid ---------------------
    B2, L2 = 300, 16
    sketchs2 = jax.random.randint(k_idx2, (B2, L2), 0, NUM_EMBEDDINGS, dtype=jnp.int32)
    lengths2 = jax.random.randint(k_len2, (B2,), 1, L2 + 1, dtype=jnp.int32)
    lengths2 = lengths2.at[0].set(L2)                          # enforce max(lengths) == L2
    out2 = sketch_embedding_forward(sketchs2, lengths2, emb_table)
    out2 = jax.block_until_ready(out2)
    ref2 = reference_forward(sketchs2, lengths2, emb_table)
    assert out2.shape == (B2, E)
    assert jnp.allclose(out2, ref2, atol=1e-4, rtol=1e-5), "mismatch vs reference (grid)"

    # --- case exercising large blocks + in-kernel sub-chunking (fori_loop) --
    B3, L3 = 1200, 16
    sketchs3 = jax.random.randint(k_idx3, (B3, L3), 0, NUM_EMBEDDINGS, dtype=jnp.int32)
    lengths3 = jax.random.randint(k_len3, (B3,), 1, L3 + 1, dtype=jnp.int32)
    lengths3 = lengths3.at[0].set(L3)
    out3 = sketch_embedding_forward(sketchs3, lengths3, emb_table, block_rows=512)
    out3 = jax.block_until_ready(out3)
    ref3 = reference_forward(sketchs3, lengths3, emb_table)
    assert out3.shape == (B3, E)
    assert jnp.allclose(out3, ref3, atol=1e-4, rtol=1e-5), "mismatch vs reference (chunked)"

    print("KERNEL_OK")
</pallas_src>

<mosaic_0001>
module attributes {stable_mosaic.version = 11 : i64} {
  func.func @kernel(%arg0: i32, %arg1: memref<1x32x32xi8, #tpu.memory_space<vmem>>, %arg2: memref<10x32x128xf32, #tpu.memory_space<vmem>>, %arg3: memref<1x32x128xf32, #tpu.memory_space<vmem>>) attributes {dimension_semantics = [#tpu.dimension_semantics<parallel>], iteration_bounds = array<i64: 1>, scalar_prefetch = 0 : i64, scratch_operands = 0 : i64, tpu.core_type = #tpu.core_type<tc>, window_params = [{transform_indices = @transform_0, window_bounds = array<i64: 1, 32, 32>}, {pipeline_mode = #tpu.pipeline_mode<synchronous>, transform_indices = @transform_1, window_bounds = array<i64: 10, 32, 128>}, {transform_indices = @transform_2, window_bounds = array<i64: 1, 32, 128>}]} {
    %c0 = arith.constant 0 : index
    %c0_0 = arith.constant 0 : index
    %c0_1 = arith.constant 0 : index
    %0 = vector.load %arg1[%c0, %c0_0, %c0_1] : memref<1x32x32xi8, #tpu.memory_space<vmem>>, vector<1x32x32xi8>
    %1 = vector.shape_cast %0 : vector<1x32x32xi8> to vector<32x32xi8>
    %2 = arith.extsi %1 : vector<32x32xi8> to vector<32x32xi32>
    %cst = arith.constant 0.000000e+00 : f32
    %3 = vector.broadcast %cst : f32 to vector<32x128xf32>
    %c0_i32 = arith.constant 0 : i32
    %4 = vector.broadcast %c0_i32 : i32 to vector<32x32xi32>
    %5 = arith.cmpi eq, %2, %4 : vector<32x32xi32>
    %6 = arith.extui %5 : vector<32x32xi1> to vector<32x32xi32>
    %7 = arith.sitofp %6 : vector<32x32xi32> to vector<32x32xf32>
    %c0_2 = arith.constant 0 : index
    %c0_3 = arith.constant 0 : index
    %c0_4 = arith.constant 0 : index
    %8 = vector.load %arg2[%c0_2, %c0_3, %c0_4] : memref<10x32x128xf32, #tpu.memory_space<vmem>>, vector<1x32x128xf32>
    %9 = vector.shape_cast %8 : vector<1x32x128xf32> to vector<32x128xf32>
    %cst_5 = arith.constant dense<0.000000e+00> : vector<32x128xf32>
    %10 = tpu.matmul %7, %9, %cst_5 {dimension_numbers = #tpu.dot_dimension_numbers<[1], [0], [0], [1], [0, 0, 1, 1], [], []>} : vector<32x32xf32>, vector<32x128xf32>, vector<32x128xf32> -> vector<32x128xf32>
    %11 = arith.addf %3, %10 : vector<32x128xf32>
    %c1_i32 = arith.constant 1 : i32
    %12 = vector.broadcast %c1_i32 : i32 to vector<32x32xi32>
    %13 = arith.cmpi eq, %2, %12 : vector<32x32xi32>
    %14 = arith.extui %13 : vector<32x32xi1> to vector<32x32xi32>
    %15 = arith.sitofp %14 : vector<32x32xi32> to vector<32x32xf32>
    %c1 = arith.constant 1 : index
    %c0_6 = arith.constant 0 : index
    %c0_7 = arith.constant 0 : index
    %16 = vector.load %arg2[%c1, %c0_6, %c0_7] : memref<10x32x128xf32, #tpu.memory_space<vmem>>, vector<1x32x128xf32>
    %17 = vector.shape_cast %16 : vector<1x32x128xf32> to vector<32x128xf32>
    %cst_8 = arith.constant dense<0.000000e+00> : vector<32x128xf32>
    %18 = tpu.matmul %15, %17, %cst_8 {dimension_numbers = #tpu.dot_dimension_numbers<[1], [0], [0], [1], [0, 0, 1, 1], [], []>} : vector<32x32xf32>, vector<32x128xf32>, vector<32x128xf32> -> vector<32x128xf32>
    %19 = arith.addf %11, %18 : vector<32x128xf32>
    %c2_i32 = arith.constant 2 : i32
    %20 = vector.broadcast %c2_i32 : i32 to vector<32x32xi32>
    %21 = arith.cmpi eq, %2, %20 : vector<32x32xi32>
    %22 = arith.extui %21 : vector<32x32xi1> to vector<32x32xi32>
    %23 = arith.sitofp %22 : vector<32x32xi32> to vector<32x32xf32>
    %c2 = arith.constant 2 : index
    %c0_9 = arith.constant 0 : index
    %c0_10 = arith.constant 0 : index
    %24 = vector.load %arg2[%c2, %c0_9, %c0_10] : memref<10x32x128xf32, #tpu.memory_space<vmem>>, vector<1x32x128xf32>
    %25 = vector.shape_cast %24 : vector<1x32x128xf32> to vector<32x128xf32>
    %cst_11 = arith.constant dense<0.000000e+00> : vector<32x128xf32>
    %26 = tpu.matmul %23, %25, %cst_11 {dimension_numbers = #tpu.dot_dimension_numbers<[1], [0], [0], [1], [0, 0, 1, 1], [], []>} : vector<32x32xf32>, vector<32x128xf32>, vector<32x128xf32> -> vector<32x128xf32>
    %27 = arith.addf %19, %26 : vector<32x128xf32>
    %c3_i32 = arith.constant 3 : i32
    %28 = vector.broadcast %c3_i32 : i32 to vector<32x32xi32>
    %29 = arith.cmpi eq, %2, %28 : vector<32x32xi32>
    %30 = arith.extui %29 : vector<32x32xi1> to vector<32x32xi32>
    %31 = arith.sitofp %30 : vector<32x32xi32> to vector<32x32xf32>
    %c3 = arith.constant 3 : index
    %c0_12 = arith.constant 0 : index
    %c0_13 = arith.constant 0 : index
    %32 = vector.load %arg2[%c3, %c0_12, %c0_13] : memref<10x32x128xf32, #tpu.memory_space<vmem>>, vector<1x32x128xf32>
    %33 = vector.shape_cast %32 : vector<1x32x128xf32> to vector<32x128xf32>
    %cst_14 = arith.constant dense<0.000000e+00> : vector<32x128xf32>
    %34 = tpu.matmul %31, %33, %cst_14 {dimension_numbers = #tpu.dot_dimension_numbers<[1], [0], [0], [1], [0, 0, 1, 1], [], []>} : vector<32x32xf32>, vector<32x128xf32>, vector<32x128xf32> -> vector<32x128xf32>
    %35 = arith.addf %27, %34 : vector<32x128xf32>
    %c4_i32 = arith.constant 4 : i32
    %36 = vector.broadcast %c4_i32 : i32 to vector<32x32xi32>
    %37 = arith.cmpi eq, %2, %36 : vector<32x32xi32>
    %38 = arith.extui %37 : vector<32x32xi1> to vector<32x32xi32>
    %39 = arith.sitofp %38 : vector<32x32xi32> to vector<32x32xf32>
    %c4 = arith.constant 4 : index
    %c0_15 = arith.constant 0 : index
    %c0_16 = arith.constant 0 : index
    %40 = vector.load %arg2[%c4, %c0_15, %c0_16] : memref<10x32x128xf32, #tpu.memory_space<vmem>>, vector<1x32x128xf32>
    %41 = vector.shape_cast %40 : vector<1x32x128xf32> to vector<32x128xf32>
    %cst_17 = arith.constant dense<0.000000e+00> : vector<32x128xf32>
    %42 = tpu.matmul %39, %41, %cst_17 {dimension_numbers = #tpu.dot_dimension_numbers<[1], [0], [0], [1], [0, 0, 1, 1], [], []>} : vector<32x32xf32>, vector<32x128xf32>, vector<32x128xf32> -> vector<32x128xf32>
    %43 = arith.addf %35, %42 : vector<32x128xf32>
    %c5_i32 = arith.constant 5 : i32
    %44 = vector.broadcast %c5_i32 : i32 to vector<32x32xi32>
    %45 = arith.cmpi eq, %2, %44 : vector<32x32xi32>
    %46 = arith.extui %45 : vector<32x32xi1> to vector<32x32xi32>
    %47 = arith.sitofp %46 : vector<32x32xi32> to vector<32x32xf32>
    %c5 = arith.constant 5 : index
    %c0_18 = arith.constant 0 : index
    %c0_19 = arith.constant 0 : index
    %48 = vector.load %arg2[%c5, %c0_18, %c0_19] : memref<10x32x128xf32, #tpu.memory_space<vmem>>, vector<1x32x128xf32>
    %49 = vector.shape_cast %48 : vector<1x32x128xf32> to vector<32x128xf32>
    %cst_20 = arith.constant dense<0.000000e+00> : vector<32x128xf32>
    %50 = tpu.matmul %47, %49, %cst_20 {dimension_numbers = #tpu.dot_dimension_numbers<[1], [0], [0], [1], [0, 0, 1, 1], [], []>} : vector<32x32xf32>, vector<32x128xf32>, vector<32x128xf32> -> vector<32x128xf32>
    %51 = arith.addf %43, %50 : vector<32x128xf32>
    %c6_i32 = arith.constant 6 : i32
    %52 = vector.broadcast %c6_i32 : i32 to vector<32x32xi32>
    %53 = arith.cmpi eq, %2, %52 : vector<32x32xi32>
    %54 = arith.extui %53 : vector<32x32xi1> to vector<32x32xi32>
    %55 = arith.sitofp %54 : vector<32x32xi32> to vector<32x32xf32>
    %c6 = arith.constant 6 : index
    %c0_21 = arith.constant 0 : index
    %c0_22 = arith.constant 0 : index
    %56 = vector.load %arg2[%c6, %c0_21, %c0_22] : memref<10x32x128xf32, #tpu.memory_space<vmem>>, vector<1x32x128xf32>
    %57 = vector.shape_cast %56 : vector<1x32x128xf32> to vector<32x128xf32>
    %cst_23 = arith.constant dense<0.000000e+00> : vector<32x128xf32>
    %58 = tpu.matmul %55, %57, %cst_23 {dimension_numbers = #tpu.dot_dimension_numbers<[1], [0], [0], [1], [0, 0, 1, 1], [], []>} : vector<32x32xf32>, vector<32x128xf32>, vector<32x128xf32> -> vector<32x128xf32>
    %59 = arith.addf %51, %58 : vector<32x128xf32>
    %c7_i32 = arith.constant 7 : i32
    %60 = vector.broadcast %c7_i32 : i32 to vector<32x32xi32>
    %61 = arith.cmpi eq, %2, %60 : vector<32x32xi32>
    %62 = arith.extui %61 : vector<32x32xi1> to vector<32x32xi32>
    %63 = arith.sitofp %62 : vector<32x32xi32> to vector<32x32xf32>
    %c7 = arith.constant 7 : index
    %c0_24 = arith.constant 0 : index
    %c0_25 = arith.constant 0 : index
    %64 = vector.load %arg2[%c7, %c0_24, %c0_25] : memref<10x32x128xf32, #tpu.memory_space<vmem>>, vector<1x32x128xf32>
    %65 = vector.shape_cast %64 : vector<1x32x128xf32> to vector<32x128xf32>
    %cst_26 = arith.constant dense<0.000000e+00> : vector<32x128xf32>
    %66 = tpu.matmul %63, %65, %cst_26 {dimension_numbers = #tpu.dot_dimension_numbers<[1], [0], [0], [1], [0, 0, 1, 1], [], []>} : vector<32x32xf32>, vector<32x128xf32>, vector<32x128xf32> -> vector<32x128xf32>
    %67 = arith.addf %59, %66 : vector<32x128xf32>
    %c8_i32 = arith.constant 8 : i32
    %68 = vector.broadcast %c8_i32 : i32 to vector<32x32xi32>
    %69 = arith.cmpi eq, %2, %68 : vector<32x32xi32>
    %70 = arith.extui %69 : vector<32x32xi1> to vector<32x32xi32>
    %71 = arith.sitofp %70 : vector<32x32xi32> to vector<32x32xf32>
    %c8 = arith.constant 8 : index
    %c0_27 = arith.constant 0 : index
    %c0_28 = arith.constant 0 : index
    %72 = vector.load %arg2[%c8, %c0_27, %c0_28] : memref<10x32x128xf32, #tpu.memory_space<vmem>>, vector<1x32x128xf32>
    %73 = vector.shape_cast %72 : vector<1x32x128xf32> to vector<32x128xf32>
    %cst_29 = arith.constant dense<0.000000e+00> : vector<32x128xf32>
    %74 = tpu.matmul %71, %73, %cst_29 {dimension_numbers = #tpu.dot_dimension_numbers<[1], [0], [0], [1], [0, 0, 1, 1], [], []>} : vector<32x32xf32>, vector<32x128xf32>, vector<32x128xf32> -> vector<32x128xf32>
    %75 = arith.addf %67, %74 : vector<32x128xf32>
    %c9_i32 = arith.constant 9 : i32
    %76 = vector.broadcast %c9_i32 : i32 to vector<32x32xi32>
    %77 = arith.cmpi eq, %2, %76 : vector<32x32xi32>
    %78 = arith.extui %77 : vector<32x32xi1> to vector<32x32xi32>
    %79 = arith.sitofp %78 : vector<32x32xi32> to vector<32x32xf32>
    %c9 = arith.constant 9 : index
    %c0_30 = arith.constant 0 : index
    %c0_31 = arith.constant 0 : index
    %80 = vector.load %arg2[%c9, %c0_30, %c0_31] : memref<10x32x128xf32, #tpu.memory_space<vmem>>, vector<1x32x128xf32>
    %81 = vector.shape_cast %80 : vector<1x32x128xf32> to vector<32x128xf32>
    %cst_32 = arith.constant dense<0.000000e+00> : vector<32x128xf32>
    %82 = tpu.matmul %79, %81, %cst_32 {dimension_numbers = #tpu.dot_dimension_numbers<[1], [0], [0], [1], [0, 0, 1, 1], [], []>} : vector<32x32xf32>, vector<32x128xf32>, vector<32x128xf32> -> vector<32x128xf32>
    %83 = arith.addf %75, %82 : vector<32x128xf32>
    %c0_33 = arith.constant 0 : index
    %c0_34 = arith.constant 0 : index
    %c0_35 = arith.constant 0 : index
    %84 = vector.load %arg3[%c0_33, %c0_34, %c0_35] : memref<1x32x128xf32, #tpu.memory_space<vmem>>, vector<1x32x128xf32>
    %85 = vector.shape_cast %84 : vector<1x32x128xf32> to vector<32x128xf32>
    %86 = vector.shape_cast %83 : vector<32x128xf32> to vector<1x32x128xf32>
    tpu.vector_store %arg3[%c0_33, %c0_34, %c0_35], %86 {strides = array<i32>} : memref<1x32x128xf32, #tpu.memory_space<vmem>>, vector<1x32x128xf32>,
    return
  }
  func.func @transform_0(%arg0: i32) -> (i32, i32, i32) {
    %c0_i32 = arith.constant 0 : i32
    %c0_i32_0 = arith.constant 0 : i32
    %c0_i32_1 = arith.constant 0 : i32
    return %arg0, %c0_i32, %c0_i32_0 : i32, i32, i32
  }
  func.func @transform_1(%arg0: i32) -> (i32, i32, i32) {
    %c0_i32 = arith.constant 0 : i32
    %c0_i32_0 = arith.constant 0 : i32
    %c0_i32_1 = arith.constant 0 : i32
    %c0_i32_2 = arith.constant 0 : i32
    return %c0_i32, %c0_i32_0, %c0_i32_1 : i32, i32, i32
  }
  func.func @transform_2(%arg0: i32) -> (i32, i32, i32) {
    %c0_i32 = arith.constant 0 : i32
    %c0_i32_0 = arith.constant 0 : i32
    %c0_i32_1 = arith.constant 0 : i32
    return %arg0, %c0_i32, %c0_i32_0 : i32, i32, i32
  }
}

</mosaic_0001>

<llo_original>
// kernel: tpu_custom_call.1
$region0: #{tpu_custom_call.1}
  #allocation0 [shape = 'u32[]', space=smem, size = 0x4, offset = 0x4, fixed_abs, tag = 'smem constant byte address 0x4 - core index']
  #allocation1 [shape = 'u32[72,128]{1,0:T(1,128)}', space=vmem, size = 0x9000, scoped, tag = 'internal scratch']
  %s0 = inlined_call_operand.hbm [shape: s8[1,32,32], index: 0, kind: input, shape index: {}]
  %s1 = inlined_call_operand.hbm [shape: f32[10,32,128], index: 1, kind: input, shape index: {}]
  %s2 = inlined_call_operand.hbm [shape: f32[1,32,128], index: 2, kind: output, shape index: {}]
  %s3 = sld [smem:[#allocation0]]
  $region26: #{tpu_custom_call.1} parent=0
    _
  %s5 = ssub.s32 1, %s3
  %s6 = scalar_select 0, %s5, %s3
  $region1: #{tpu_custom_call.1} parent=0
    #allocation2 [shape = 'u8[4096]{0}', space=vmem, size = 0x1000, scoped, tag = 'input window, operand 0, single buffered']
    #allocation3 [shape = 's32[1]{0}', space=sflag, size = 0x4, scoped, tag = 'scoped memory for tpu_custom_call.1']
    #allocation4 [shape = 's32[1]{0}', space=sflag, size = 0x4, scoped, tag = 'scoped memory for tpu_custom_call.1']
    #allocation5 [shape = 'u8[163840]{0}', space=vmem, size = 0x28000, scoped, tag = 'input window, operand 1, single buffered']
    #allocation6 [shape = 's32[1]{0}', space=sflag, size = 0x4, scoped, tag = 'scoped memory for tpu_custom_call.1']
    #allocation7 [shape = 'u8[16384]{0}', space=vmem, size = 0x4000, scoped, tag = 'output window, operand 0, single buffered']
    %7 = vsyncpa [#allocation3], 0
    %8 = vsyncpa [#allocation6], 0
    %9 = vsyncpa [#allocation4], 0
    // Predicated region
    $region2: #{tpu_custom_call.1} parent=1 // pred_check
      _
    $region3: #{tpu_custom_call.1} parent=1 // pred_check_branch
      %11 = sbr.rel (0) target = $region5
    $region4: #{tpu_custom_call.1} parent=1 // pred_region
      %13 = vsyncadd [#allocation3], 0
      %s15 = sshll.u32 %s0, 4
      %s16 = int_to_ptr.hbm [resolvable:$true] %s15
      %s17 = sshll.u32 [#allocation2], 4
      %s18 = int_to_ptr.vmem [resolvable:$true] %s17
      %20 = dma.hbm_to_vmem [thread:$0]  %s16, 128, %s18, [#allocation3]
    $region5: #{tpu_custom_call.1} parent=1 // pred_fallthru
      _
    // Predicated region
    $region6: #{tpu_custom_call.1} parent=1 // pred_check
      _
    $region7: #{tpu_custom_call.1} parent=1 // pred_check_branch
      %22 = sbr.rel (0) target = $region9
    $region8: #{tpu_custom_call.1} parent=1 // pred_region
      %24 = vsyncadd [#allocation6], 0
      %s25 = sshll.u32 %s1, 4
      %s26 = int_to_ptr.hbm [resolvable:$true] %s25
      %s27 = sshll.u32 [#allocation5], 4
      %s28 = int_to_ptr.vmem [resolvable:$true] %s27
      %33 = dma.hbm_to_vmem [thread:$0]  %s26, 5120, %s28, [#allocation6], 128, 128, 8
    $region9: #{tpu_custom_call.1} parent=1 // pred_fallthru
      _
    // Predicated region
    $region10: #{tpu_custom_call.1} parent=1 // pred_check
      _
    $region11: #{tpu_custom_call.1} parent=1 // pred_check_branch
      %35 = sbr.rel (0) target = $region13
    $region12: #{tpu_custom_call.1} parent=1 // pred_region
      %37 = dma.done [#allocation3], 128
    $region13: #{tpu_custom_call.1} parent=1 // pred_fallthru
      _
    // Predicated region
    $region14: #{tpu_custom_call.1} parent=1 // pred_check
      _
    $region15: #{tpu_custom_call.1} parent=1 // pred_check_branch
      %39 = sbr.rel (0) target = $region17
    $region16: #{tpu_custom_call.1} parent=1 // pred_region
      %41 = dma.done [#allocation6], 5120
    $region17: #{tpu_custom_call.1} parent=1 // pred_fallthru
      _
    %v42 = vld [vmem:[#allocation2] sm:$0xff]
    %v43 = vunpack.c.0.s8 %v42
    %v44 = vunpack.c.1.s8 %v42
    %v45 = vunpack.c.2.s8 %v42
    %v46 = vunpack.c.3.s8 %v42
    %vm47 = vcmp.eq.s32.totalorder %v43, 0
    %vm48 = vcmp.eq.s32.totalorder %v44, 0
    %vm49 = vcmp.eq.s32.totalorder %v45, 0
    %vm50 = vcmp.eq.s32.totalorder %v46, 0
    %v51 = vsel %vm47, 1, 0
    %v52 = vsel %vm48, 1, 0
    %v53 = vsel %vm49, 1, 0
    %v54 = vsel %vm50, 1, 0
    %v55 = vcvt.s32.f32 %v51
    %v56 = vcvt.s32.f32 %v52
    %v57 = vcvt.s32.f32 %v53
    %v58 = vcvt.s32.f32 %v54
    %v59 = vld [vmem:[#allocation5] sm:$0xff]
    %v60 = vld [vmem:[#allocation5 + $0x8] sm:$0xff]
    %v61 = vld [vmem:[#allocation5 + $0x10] sm:$0xff]
    %v62 = vld [vmem:[#allocation5 + $0x18] sm:$0xff]
    %vm63 = vcmp.eq.s32.totalorder %v43, 1
    %vm64 = vcmp.eq.s32.totalorder %v44, 1
    %vm65 = vcmp.eq.s32.totalorder %v45, 1
    %vm66 = vcmp.eq.s32.totalorder %v46, 1
    %v67 = vsel %vm63, 1, 0
    %v68 = vsel %vm64, 1, 0
    %v69 = vsel %vm65, 1, 0
    %v70 = vsel %vm66, 1, 0
    %v71 = vcvt.s32.f32 %v67
    %v72 = vcvt.s32.f32 %v68
    %v73 = vcvt.s32.f32 %v69
    %v74 = vcvt.s32.f32 %v70
    %s75 = scalar_lea.vmem [#allocation5], 32
    %v76 = vld [vmem:[%s75] sm:$0xff]
    %v77 = vld [vmem:[%s75 + $0x8] sm:$0xff]
    %v78 = vld [vmem:[%s75 + $0x10] sm:$0xff]
    %v79 = vld [vmem:[%s75 + $0x18] sm:$0xff]
    %vm80 = vcmask 261120
    %v82 = vsel %vm80, %v71, 0
    %v85 = vsel %vm80, %v72, 0
    %v88 = vsel %vm80, %v73, 0
    %v91 = vsel %vm80, %v74, 0
    %93 = vmatpush.msra.mxu0 0.0
    %94 = vmatpush.msra.mxu0 0.0
    %95 = vmatpush.msra.mxu0 0.0
    %96 = vmatpush.msra.mxu0 0.0
    %97 = vmatpush.msra.mxu0 0.0
    %98 = vmatpush.msra.mxu0 0.0
    %99 = vmatpush.msra.mxu0 0.0
    %100 = vmatpush.msra.mxu0 0.0
    %101 = vmatpush.msra.mxu0 0.0
    %102 = vmatpush.msra.mxu0 0.0
    %103 = vmatpush.msra.mxu0 0.0
    %104 = vmatpush.msra.mxu0 0.0
    %105 = vmatpush.msra.mxu0 %v79
    %106 = vmatpush.msra.mxu0 %v78
    %107 = vmatpush.msra.mxu0 %v77
    %108 = vmatpush.msra.mxu0 %v76
    %109 = vmatmul.f32.gmra.mxu0 %v82
    %v110 = vpop.f32.mrf.mxu0
    %v111 = vadd.f32 0.0, %v110
    %112 = vmatmul.f32.gmra.mxu0 %v85
    %v113 = vpop.f32.mrf.mxu0
    %v114 = vadd.f32 0.0, %v113
    %115 = vmatmul.f32.gmra.mxu0 %v88
    %v116 = vpop.f32.mrf.mxu0
    %v117 = vadd.f32 0.0, %v116
    %118 = vmatmul.f32.gmra.mxu0 %v91
    %v119 = vpop.f32.mrf.mxu0
    %v120 = vadd.f32 0.0, %v119
    %121 = vdwg.mxu0
    %v123 = vsel %vm80, %v55, 0
    %v126 = vsel %vm80, %v56, 0
    %v129 = vsel %vm80, %v57, 0
    %v132 = vsel %vm80, %v58, 0
    %134 = vmatpush.msra.mxu0 0.0
    %135 = vmatpush.msra.mxu0 0.0
    %136 = vmatpush.msra.mxu0 0.0
    %137 = vmatpush.msra.mxu0 0.0
    %138 = vmatpush.msra.mxu0 0.0
    %139 = vmatpush.msra.mxu0 0.0
    %140 = vmatpush.msra.mxu0 0.0
    %141 = vmatpush.msra.mxu0 0.0
    %142 = vmatpush.msra.mxu0 0.0
    %143 = vmatpush.msra.mxu0 0.0
    %144 = vmatpush.msra.mxu0 0.0
    %145 = vmatpush.msra.mxu0 0.0
    %146 = vmatpush.msra.mxu0 %v62
    %147 = vmatpush.msra.mxu0 %v61
    %148 = vmatpush.msra.mxu0 %v60
    %149 = vmatpush.msra.mxu0 %v59
    %150 = vmatmul.f32.gmra.mxu0 %v123
    %v151 = vpop.f32.mrf.mxu0
    %v152 = vadd.f32 %v111, %v151
    %153 = vmatmul.f32.gmra.mxu0 %v126
    %v154 = vpop.f32.mrf.mxu0
    %v155 = vadd.f32 %v114, %v154
    %156 = vmatmul.f32.gmra.mxu0 %v129
    %v157 = vpop.f32.mrf.mxu0
    %v158 = vadd.f32 %v117, %v157
    %159 = vmatmul.f32.gmra.mxu0 %v132
    %v160 = vpop.f32.mrf.mxu0
    %v161 = vadd.f32 %v120, %v160
    %162 = vdwg.mxu0
    %vm163 = vcmp.eq.s32.totalorder %v43, 2
    %vm164 = vcmp.eq.s32.totalorder %v44, 2
    %vm165 = vcmp.eq.s32.totalorder %v45, 2
    %vm166 = vcmp.eq.s32.totalorder %v46, 2
    %v167 = vsel %vm163, 1, 0
    %v168 = vsel %vm164, 1, 0
    %v169 = vsel %vm165, 1, 0
    %v170 = vsel %vm166, 1, 0
    %v171 = vcvt.s32.f32 %v167
    %v172 = vcvt.s32.f32 %v168
    %v173 = vcvt.s32.f32 %v169
    %v174 = vcvt.s32.f32 %v170
    %s175 = scalar_lea.vmem [#allocation5], 64
    %v176 = vld [vmem:[%s175] sm:$0xff]
    %v177 = vld [vmem:[%s175 + $0x8] sm:$0xff]
    %v178 = vld [vmem:[%s175 + $0x10] sm:$0xff]
    %v179 = vld [vmem:[%s175 + $0x18] sm:$0xff]
    %v181 = vsel %vm80, %v171, 0
    %v184 = vsel %vm80, %v172, 0
    %v187 = vsel %vm80, %v173, 0
    %v190 = vsel %vm80, %v174, 0
    %192 = vmatpush.msra.mxu0 0.0
    %193 = vmatpush.msra.mxu0 0.0
    %194 = vmatpush.msra.mxu0 0.0
    %195 = vmatpush.msra.mxu0 0.0
    %196 = vmatpush.msra.mxu0 0.0
    %197 = vmatpush.msra.mxu0 0.0
    %198 = vmatpush.msra.mxu0 0.0
    %199 = vmatpush.msra.mxu0 0.0
    %200 = vmatpush.msra.mxu0 0.0
    %201 = vmatpush.msra.mxu0 0.0
    %202 = vmatpush.msra.mxu0 0.0
    %203 = vmatpush.msra.mxu0 0.0
    %204 = vmatpush.msra.mxu0 %v179
    %205 = vmatpush.msra.mxu0 %v178
    %206 = vmatpush.msra.mxu0 %v177
    %207 = vmatpush.msra.mxu0 %v176
    %208 = vmatmul.f32.gmra.mxu0 %v181
    %v209 = vpop.f32.mrf.mxu0
    %v210 = vadd.f32 0.0, %v209
    %211 = vmatmul.f32.gmra.mxu0 %v184
    %v212 = vpop.f32.mrf.mxu0
    %v213 = vadd.f32 0.0, %v212
    %214 = vmatmul.f32.gmra.mxu0 %v187
    %v215 = vpop.f32.mrf.mxu0
    %v216 = vadd.f32 0.0, %v215
    %217 = vmatmul.f32.gmra.mxu0 %v190
    %v218 = vpop.f32.mrf.mxu0
    %v219 = vadd.f32 0.0, %v218
    %220 = vdwg.mxu0
    %v221 = vadd.f32 %v152, %v210
    %v222 = vadd.f32 %v155, %v213
    %v223 = vadd.f32 %v158, %v216
    %v224 = vadd.f32 %v161, %v219
    %vm225 = vcmp.eq.s32.totalorder %v43, 3
    %vm226 = vcmp.eq.s32.totalorder %v44, 3
    %vm227 = vcmp.eq.s32.totalorder %v45, 3
    %vm228 = vcmp.eq.s32.totalorder %v46, 3
    %v229 = vsel %vm225, 1, 0
    %v230 = vsel %vm226, 1, 0
    %v231 = vsel %vm227, 1, 0
    %v232 = vsel %vm228, 1, 0
    %v233 = vcvt.s32.f32 %v229
    %v234 = vcvt.s32.f32 %v230
    %v235 = vcvt.s32.f32 %v231
    %v236 = vcvt.s32.f32 %v232
    %s237 = scalar_lea.vmem [#allocation5], 96
    %v238 = vld [vmem:[%s237] sm:$0xff]
    %v239 = vld [vmem:[%s237 + $0x8] sm:$0xff]
    %v240 = vld [vmem:[%s237 + $0x10] sm:$0xff]
    %v241 = vld [vmem:[%s237 + $0x18] sm:$0xff]
    %v243 = vsel %vm80, %v233, 0
    %v246 = vsel %vm80, %v234, 0
    %v249 = vsel %vm80, %v235, 0
    %v252 = vsel %vm80, %v236, 0
    %254 = vmatpush.msra.mxu0 0.0
    %255 = vmatpush.msra.mxu0 0.0
    %256 = vmatpush.msra.mxu0 0.0
    %257 = vmatpush.msra.mxu0 0.0
    %258 = vmatpush.msra.mxu0 0.0
    %259 = vmatpush.msra.mxu0 0.0
    %260 = vmatpush.msra.mxu0 0.0
    %261 = vmatpush.msra.mxu0 0.0
    %262 = vmatpush.msra.mxu0 0.0
    %263 = vmatpush.msra.mxu0 0.0
    %264 = vmatpush.msra.mxu0 0.0
    %265 = vmatpush.msra.mxu0 0.0
    %266 = vmatpush.msra.mxu0 %v241
    %267 = vmatpush.msra.mxu0 %v240
    %268 = vmatpush.msra.mxu0 %v239
    %269 = vmatpush.msra.mxu0 %v238
    %270 = vmatmul.f32.gmra.mxu0 %v243
    %v271 = vpop.f32.mrf.mxu0
    %v272 = vadd.f32 0.0, %v271
    %273 = vmatmul.f32.gmra.mxu0 %v246
    %v274 = vpop.f32.mrf.mxu0
    %v275 = vadd.f32 0.0, %v274
    %276 = vmatmul.f32.gmra.mxu0 %v249
    %v277 = vpop.f32.mrf.mxu0
    %v278 = vadd.f32 0.0, %v277
    %279 = vmatmul.f32.gmra.mxu0 %v252
    %v280 = vpop.f32.mrf.mxu0
    %v281 = vadd.f32 0.0, %v280
    %282 = vdwg.mxu0
    %v283 = vadd.f32 %v221, %v272
    %v284 = vadd.f32 %v222, %v275
    %v285 = vadd.f32 %v223, %v278
    %v286 = vadd.f32 %v224, %v281
    %vm287 = vcmp.eq.s32.totalorder %v43, 4
    %vm288 = vcmp.eq.s32.totalorder %v44, 4
    %vm289 = vcmp.eq.s32.totalorder %v45, 4
    %vm290 = vcmp.eq.s32.totalorder %v46, 4
    %v291 = vsel %vm287, 1, 0
    %v292 = vsel %vm288, 1, 0
    %v293 = vsel %vm289, 1, 0
    %v294 = vsel %vm290, 1, 0
    %v295 = vcvt.s32.f32 %v291
    %v296 = vcvt.s32.f32 %v292
    %v297 = vcvt.s32.f32 %v293
    %v298 = vcvt.s32.f32 %v294
    %s299 = scalar_lea.vmem [#allocation5], 128
    %v300 = vld [vmem:[%s299] sm:$0xff]
    %v301 = vld [vmem:[%s299 + $0x8] sm:$0xff]
    %v302 = vld [vmem:[%s299 + $0x10] sm:$0xff]
    %v303 = vld [vmem:[%s299 + $0x18] sm:$0xff]
    %v305 = vsel %vm80, %v295, 0
    %v308 = vsel %vm80, %v296, 0
    %v311 = vsel %vm80, %v297, 0
    %v314 = vsel %vm80, %v298, 0
    %316 = vmatpush.msra.mxu0 0.0
    %317 = vmatpush.msra.mxu0 0.0
    %318 = vmatpush.msra.mxu0 0.0
    %319 = vmatpush.msra.mxu0 0.0
    %320 = vmatpush.msra.mxu0 0.0
    %321 = vmatpush.msra.mxu0 0.0
    %322 = vmatpush.msra.mxu0 0.0
    %323 = vmatpush.msra.mxu0 0.0
    %324 = vmatpush.msra.mxu0 0.0
    %325 = vmatpush.msra.mxu0 0.0
    %326 = vmatpush.msra.mxu0 0.0
    %327 = vmatpush.msra.mxu0 0.0
    %328 = vmatpush.msra.mxu0 %v303
    %329 = vmatpush.msra.mxu0 %v302
    %330 = vmatpush.msra.mxu0 %v301
    %331 = vmatpush.msra.mxu0 %v300
    %332 = vmatmul.f32.gmra.mxu0 %v305
    %v333 = vpop.f32.mrf.mxu0
    %v334 = vadd.f32 0.0, %v333
    %335 = vmatmul.f32.gmra.mxu0 %v308
    %v336 = vpop.f32.mrf.mxu0
    %v337 = vadd.f32 0.0, %v336
    %338 = vmatmul.f32.gmra.mxu0 %v311
    %v339 = vpop.f32.mrf.mxu0
    %v340 = vadd.f32 0.0, %v339
    %341 = vmatmul.f32.gmra.mxu0 %v314
    %v342 = vpop.f32.mrf.mxu0
    %v343 = vadd.f32 0.0, %v342
    %344 = vdwg.mxu0
    %v345 = vadd.f32 %v283, %v334
    %v346 = vadd.f32 %v284, %v337
    %v347 = vadd.f32 %v285, %v340
    %v348 = vadd.f32 %v286, %v343
    %vm349 = vcmp.eq.s32.totalorder %v43, 5
    %vm350 = vcmp.eq.s32.totalorder %v44, 5
    %vm351 = vcmp.eq.s32.totalorder %v45, 5
    %vm352 = vcmp.eq.s32.totalorder %v46, 5
    %v353 = vsel %vm349, 1, 0
    %v354 = vsel %vm350, 1, 0
    %v355 = vsel %vm351, 1, 0
    %v356 = vsel %vm352, 1, 0
    %v357 = vcvt.s32.f32 %v353
    %v358 = vcvt.s32.f32 %v354
    %v359 = vcvt.s32.f32 %v355
    %v360 = vcvt.s32.f32 %v356
    %s361 = scalar_lea.vmem [#allocation5], 160
    %v362 = vld [vmem:[%s361] sm:$0xff]
    %v363 = vld [vmem:[%s361 + $0x8] sm:$0xff]
    %v364 = vld [vmem:[%s361 + $0x10] sm:$0xff]
    %v365 = vld [vmem:[%s361 + $0x18] sm:$0xff]
    %v367 = vsel %vm80, %v357, 0
    %v370 = vsel %vm80, %v358, 0
    %v373 = vsel %vm80, %v359, 0
    %v376 = vsel %vm80, %v360, 0
    %378 = vmatpush.msra.mxu0 0.0
    %379 = vmatpush.msra.mxu0 0.0
    %380 = vmatpush.msra.mxu0 0.0
    %381 = vmatpush.msra.mxu0 0.0
    %382 = vmatpush.msra.mxu0 0.0
    %383 = vmatpush.msra.mxu0 0.0
    %384 = vmatpush.msra.mxu0 0.0
    %385 = vmatpush.msra.mxu0 0.0
    %386 = vmatpush.msra.mxu0 0.0
    %387 = vmatpush.msra.mxu0 0.0
    %388 = vmatpush.msra.mxu0 0.0
    %389 = vmatpush.msra.mxu0 0.0
    %390 = vmatpush.msra.mxu0 %v365
    %391 = vmatpush.msra.mxu0 %v364
    %392 = vmatpush.msra.mxu0 %v363
    %393 = vmatpush.msra.mxu0 %v362
    %394 = vmatmul.f32.gmra.mxu0 %v367
    %v395 = vpop.f32.mrf.mxu0
    %v396 = vadd.f32 0.0, %v395
    %397 = vmatmul.f32.gmra.mxu0 %v370
    %v398 = vpop.f32.mrf.mxu0
    %v399 = vadd.f32 0.0, %v398
    %400 = vmatmul.f32.gmra.mxu0 %v373
    %v401 = vpop.f32.mrf.mxu0
    %v402 = vadd.f32 0.0, %v401
    %403 = vmatmul.f32.gmra.mxu0 %v376
    %v404 = vpop.f32.mrf.mxu0
    %v405 = vadd.f32 0.0, %v404
    %406 = vdwg.mxu0
    %v407 = vadd.f32 %v345, %v396
    %v408 = vadd.f32 %v346, %v399
    %v409 = vadd.f32 %v347, %v402
    %v410 = vadd.f32 %v348, %v405
    %vm411 = vcmp.eq.s32.totalorder %v43, 6
    %vm412 = vcmp.eq.s32.totalorder %v44, 6
    %vm413 = vcmp.eq.s32.totalorder %v45, 6
    %vm414 = vcmp.eq.s32.totalorder %v46, 6
    %v415 = vsel %vm411, 1, 0
    %v416 = vsel %vm412, 1, 0
    %v417 = vsel %vm413, 1, 0
    %v418 = vsel %vm414, 1, 0
    %v419 = vcvt.s32.f32 %v415
    %v420 = vcvt.s32.f32 %v416
    %v421 = vcvt.s32.f32 %v417
    %v422 = vcvt.s32.f32 %v418
    %s423 = scalar_lea.vmem [#allocation5], 192
    %v424 = vld [vmem:[%s423] sm:$0xff]
    %v425 = vld [vmem:[%s423 + $0x8] sm:$0xff]
    %v426 = vld [vmem:[%s423 + $0x10] sm:$0xff]
    %v427 = vld [vmem:[%s423 + $0x18] sm:$0xff]
    %v429 = vsel %vm80, %v419, 0
    %v432 = vsel %vm80, %v420, 0
    %v435 = vsel %vm80, %v421, 0
    %v438 = vsel %vm80, %v422, 0
    %440 = vmatpush.msra.mxu0 0.0
    %441 = vmatpush.msra.mxu0 0.0
    %442 = vmatpush.msra.mxu0 0.0
    %443 = vmatpush.msra.mxu0 0.0
    %444 = vmatpush.msra.mxu0 0.0
    %445 = vmatpush.msra.mxu0 0.0
    %446 = vmatpush.msra.mxu0 0.0
    %447 = vmatpush.msra.mxu0 0.0
    %448 = vmatpush.msra.mxu0 0.0
    %449 = vmatpush.msra.mxu0 0.0
    %450 = vmatpush.msra.mxu0 0.0
    %451 = vmatpush.msra.mxu0 0.0
    %452 = vmatpush.msra.mxu0 %v427
    %453 = vmatpush.msra.mxu0 %v426
    %454 = vmatpush.msra.mxu0 %v425
    %455 = vmatpush.msra.mxu0 %v424
    %456 = vmatmul.f32.gmra.mxu0 %v429
    %v457 = vpop.f32.mrf.mxu0
    %v458 = vadd.f32 0.0, %v457
    %459 = vmatmul.f32.gmra.mxu0 %v432
    %v460 = vpop.f32.mrf.mxu0
    %v461 = vadd.f32 0.0, %v460
    %462 = vmatmul.f32.gmra.mxu0 %v435
    %v463 = vpop.f32.mrf.mxu0
    %v464 = vadd.f32 0.0, %v463
    %465 = vmatmul.f32.gmra.mxu0 %v438
    %v466 = vpop.f32.mrf.mxu0
    %v467 = vadd.f32 0.0, %v466
    %468 = vdwg.mxu0
    %v469 = vadd.f32 %v407, %v458
    %v470 = vadd.f32 %v408, %v461
    %v471 = vadd.f32 %v409, %v464
    %v472 = vadd.f32 %v410, %v467
    %vm473 = vcmp.eq.s32.totalorder %v43, 7
    %vm474 = vcmp.eq.s32.totalorder %v44, 7
    %vm475 = vcmp.eq.s32.totalorder %v45, 7
    %vm476 = vcmp.eq.s32.totalorder %v46, 7
    %v477 = vsel %vm473, 1, 0
    %v478 = vsel %vm474, 1, 0
    %v479 = vsel %vm475, 1, 0
    %v480 = vsel %vm476, 1, 0
    %v481 = vcvt.s32.f32 %v477
    %v482 = vcvt.s32.f32 %v478
    %v483 = vcvt.s32.f32 %v479
    %v484 = vcvt.s32.f32 %v480
    %s485 = scalar_lea.vmem [#allocation5], 224
    %v486 = vld [vmem:[%s485] sm:$0xff]
    %v487 = vld [vmem:[%s485 + $0x8] sm:$0xff]
    %v488 = vld [vmem:[%s485 + $0x10] sm:$0xff]
    %v489 = vld [vmem:[%s485 + $0x18] sm:$0xff]
    %v491 = vsel %vm80, %v481, 0
    %v494 = vsel %vm80, %v482, 0
    %v497 = vsel %vm80, %v483, 0
    %v500 = vsel %vm80, %v484, 0
    %502 = vmatpush.msra.mxu0 0.0
    %503 = vmatpush.msra.mxu0 0.0
    %504 = vmatpush.msra.mxu0 0.0
    %505 = vmatpush.msra.mxu0 0.0
    %506 = vmatpush.msra.mxu0 0.0
    %507 = vmatpush.msra.mxu0 0.0
    %508 = vmatpush.msra.mxu0 0.0
    %509 = vmatpush.msra.mxu0 0.0
    %510 = vmatpush.msra.mxu0 0.0
    %511 = vmatpush.msra.mxu0 0.0
    %512 = vmatpush.msra.mxu0 0.0
    %513 = vmatpush.msra.mxu0 0.0
    %514 = vmatpush.msra.mxu0 %v489
    %515 = vmatpush.msra.mxu0 %v488
    %516 = vmatpush.msra.mxu0 %v487
    %517 = vmatpush.msra.mxu0 %v486
    %518 = vmatmul.f32.gmra.mxu0 %v491
    %v519 = vpop.f32.mrf.mxu0
    %v520 = vadd.f32 0.0, %v519
    %521 = vmatmul.f32.gmra.mxu0 %v494
    %v522 = vpop.f32.mrf.mxu0
    %v523 = vadd.f32 0.0, %v522
    %524 = vmatmul.f32.gmra.mxu0 %v497
    %v525 = vpop.f32.mrf.mxu0
    %v526 = vadd.f32 0.0, %v525
    %527 = vmatmul.f32.gmra.mxu0 %v500
    %v528 = vpop.f32.mrf.mxu0
    %v529 = vadd.f32 0.0, %v528
    %530 = vdwg.mxu0
    %v531 = vadd.f32 %v469, %v520
    %v532 = vadd.f32 %v470, %v523
    %v533 = vadd.f32 %v471, %v526
    %v534 = vadd.f32 %v472, %v529
    %vm535 = vcmp.eq.s32.totalorder %v43, 8
    %vm536 = vcmp.eq.s32.totalorder %v44, 8
    %vm537 = vcmp.eq.s32.totalorder %v45, 8
    %vm538 = vcmp.eq.s32.totalorder %v46, 8
    %v539 = vsel %vm535, 1, 0
    %v540 = vsel %vm536, 1, 0
    %v541 = vsel %vm537, 1, 0
    %v542 = vsel %vm538, 1, 0
    %v543 = vcvt.s32.f32 %v539
    %v544 = vcvt.s32.f32 %v540
    %v545 = vcvt.s32.f32 %v541
    %v546 = vcvt.s32.f32 %v542
    %s547 = scalar_lea.vmem [#allocation5], 256
    %v548 = vld [vmem:[%s547] sm:$0xff]
    %v549 = vld [vmem:[%s547 + $0x8] sm:$0xff]
    %v550 = vld [vmem:[%s547 + $0x10] sm:$0xff]
    %v551 = vld [vmem:[%s547 + $0x18] sm:$0xff]
    %v553 = vsel %vm80, %v543, 0
    %v556 = vsel %vm80, %v544, 0
    %v559 = vsel %vm80, %v545, 0
    %v562 = vsel %vm80, %v546, 0
    %564 = vmatpush.msra.mxu0 0.0
    %565 = vmatpush.msra.mxu0 0.0
    %566 = vmatpush.msra.mxu0 0.0
    %567 = vmatpush.msra.mxu0 0.0
    %568 = vmatpush.msra.mxu0 0.0
    %569 = vmatpush.msra.mxu0 0.0
    %570 = vmatpush.msra.mxu0 0.0
    %571 = vmatpush.msra.mxu0 0.0
    %572 = vmatpush.msra.mxu0 0.0
    %573 = vmatpush.msra.mxu0 0.0
    %574 = vmatpush.msra.mxu0 0.0
    %575 = vmatpush.msra.mxu0 0.0
    %576 = vmatpush.msra.mxu0 %v551
    %577 = vmatpush.msra.mxu0 %v550
    %578 = vmatpush.msra.mxu0 %v549
    %579 = vmatpush.msra.mxu0 %v548
    %580 = vmatmul.f32.gmra.mxu0 %v553
    %v581 = vpop.f32.mrf.mxu0
    %v582 = vadd.f32 0.0, %v581
    %583 = vmatmul.f32.gmra.mxu0 %v556
    %v584 = vpop.f32.mrf.mxu0
    %v585 = vadd.f32 0.0, %v584
    %586 = vmatmul.f32.gmra.mxu0 %v559
    %v587 = vpop.f32.mrf.mxu0
    %v588 = vadd.f32 0.0, %v587
    %589 = vmatmul.f32.gmra.mxu0 %v562
    %v590 = vpop.f32.mrf.mxu0
    %v591 = vadd.f32 0.0, %v590
    %592 = vdwg.mxu0
    %v593 = vadd.f32 %v531, %v582
    %v594 = vadd.f32 %v532, %v585
    %v595 = vadd.f32 %v533, %v588
    %v596 = vadd.f32 %v534, %v591
    %vm597 = vcmp.eq.s32.totalorder %v43, 9
    %vm598 = vcmp.eq.s32.totalorder %v44, 9
    %vm599 = vcmp.eq.s32.totalorder %v45, 9
    %vm600 = vcmp.eq.s32.totalorder %v46, 9
    %v601 = vsel %vm597, 1, 0
    %v602 = vsel %vm598, 1, 0
    %v603 = vsel %vm599, 1, 0
    %v604 = vsel %vm600, 1, 0
    %v605 = vcvt.s32.f32 %v601
    %v606 = vcvt.s32.f32 %v602
    %v607 = vcvt.s32.f32 %v603
    %v608 = vcvt.s32.f32 %v604
    %s609 = scalar_lea.vmem [#allocation5], 288
    %v610 = vld [vmem:[%s609] sm:$0xff]
    %v611 = vld [vmem:[%s609 + $0x8] sm:$0xff]
    %v612 = vld [vmem:[%s609 + $0x10] sm:$0xff]
    %v613 = vld [vmem:[%s609 + $0x18] sm:$0xff]
    %v615 = vsel %vm80, %v605, 0
    %v618 = vsel %vm80, %v606, 0
    %v621 = vsel %vm80, %v607, 0
    %v624 = vsel %vm80, %v608, 0
    %626 = vmatpush.msra.mxu0 0.0
    %627 = vmatpush.msra.mxu0 0.0
    %628 = vmatpush.msra.mxu0 0.0
    %629 = vmatpush.msra.mxu0 0.0
    %630 = vmatpush.msra.mxu0 0.0
    %631 = vmatpush.msra.mxu0 0.0
    %632 = vmatpush.msra.mxu0 0.0
    %633 = vmatpush.msra.mxu0 0.0
    %634 = vmatpush.msra.mxu0 0.0
    %635 = vmatpush.msra.mxu0 0.0
    %636 = vmatpush.msra.mxu0 0.0
    %637 = vmatpush.msra.mxu0 0.0
    %638 = vmatpush.msra.mxu0 %v613
    %639 = vmatpush.msra.mxu0 %v612
    %640 = vmatpush.msra.mxu0 %v611
    %641 = vmatpush.msra.mxu0 %v610
    %642 = vmatmul.f32.gmra.mxu0 %v615
    %v643 = vpop.f32.mrf.mxu0
    %v644 = vadd.f32 0.0, %v643
    %645 = vmatmul.f32.gmra.mxu0 %v618
    %v646 = vpop.f32.mrf.mxu0
    %v647 = vadd.f32 0.0, %v646
    %648 = vmatmul.f32.gmra.mxu0 %v621
    %v649 = vpop.f32.mrf.mxu0
    %v650 = vadd.f32 0.0, %v649
    %651 = vmatmul.f32.gmra.mxu0 %v624
    %v652 = vpop.f32.mrf.mxu0
    %v653 = vadd.f32 0.0, %v652
    %654 = vdwg.mxu0
    %v655 = vadd.f32 %v593, %v644
    %v656 = vadd.f32 %v594, %v647
    %v657 = vadd.f32 %v595, %v650
    %v658 = vadd.f32 %v596, %v653
    %659 = vst [vmem:[#allocation7] sm:$0xff] %v655
    %660 = vst [vmem:[#allocation7 + $0x8] sm:$0xff] %v656
    %661 = vst [vmem:[#allocation7 + $0x10] sm:$0xff] %v657
    %662 = vst [vmem:[#allocation7 + $0x18] sm:$0xff] %v658
    // Predicated region
    $region18: #{tpu_custom_call.1} parent=1 // pred_check
      _
    $region19: #{tpu_custom_call.1} parent=1 // pred_check_branch
      %664 = sbr.rel (0) target = $region21
    $region20: #{tpu_custom_call.1} parent=1 // pred_region
      %666 = vsyncadd [#allocation4], 0
      %s667 = sshll.u32 [#allocation7], 4
      %s668 = int_to_ptr.vmem [resolvable:$true] %s667
      %s669 = sshll.u32 %s2, 4
      %s670 = int_to_ptr.hbm [resolvable:$true] %s669
      %675 = dma.vmem_to_hbm [thread:$0]  %s668, 512, %s670, [#allocation4], 128, 128, 8
    $region21: #{tpu_custom_call.1} parent=1 // pred_fallthru
      _
    // Predicated region
    $region22: #{tpu_custom_call.1} parent=1 // pred_check
      _
    $region23: #{tpu_custom_call.1} parent=1 // pred_check_branch
      %677 = sbr.rel (0) target = $region25
    $region24: #{tpu_custom_call.1} parent=1 // pred_region
      %679 = dma.done [#allocation4], 512
    $region25: #{tpu_custom_call.1} parent=1 // pred_fallthru
      _
    %680 = vsyncpa [#allocation3], 1
    %681 = vsyncpa [#allocation6], 1
    %682 = vsyncpa [#allocation4], 1

</llo_original>
